<compile_context>
chip_gen: v5e
topology: v5e:2x2
jax: 0.10.0
libtpu: 0.0.40
codegen_flags: <defaults>
</compile_context>

<pallas_src>
import functools

import jax
import jax.numpy as jnp
from jax.experimental import pallas as pl
from jax.experimental.pallas import tpu as pltpu


# ------------------------------ Pallas kernel -------------------------------

def _maxpool_kernel(x_ref, o_ref, *scratch, k, s, p, H, W, Hp, Wp, Ho, Wo):
    """Fused MaxPool2d on one channels-last block.

    x_ref : (H,  W,  Ct)   input block  (VMEM), channels on lanes
    o_ref : (Ho, Wo, Ct)   output block (VMEM)
    scratch:
      [xp_ref (Hp, Wp, Ct)]  padded copy   (only when p > 0)
       mh_ref (Ho, Wp, Ct)   kh-reduced intermediate
    """
    dtype = x_ref.dtype
    Ct = x_ref.shape[-1]

    if p > 0:
        xp_ref, mh_ref = scratch
        # Identity element of max (exact for both float and int dtypes).
        if jnp.issubdtype(dtype, jnp.floating):
            neg = jnp.finfo(dtype).min
        else:
            neg = jnp.iinfo(dtype).min
        # Border-only init; interior written exactly once (no double writes).
        xp_ref[0:p, :, :] = jnp.full((p, Wp, Ct), neg, dtype)
        xp_ref[p + H:Hp, :, :] = jnp.full((p, Wp, Ct), neg, dtype)
        xp_ref[p:p + H, 0:p, :] = jnp.full((H, p, Ct), neg, dtype)
        xp_ref[p:p + H, p + W:Wp, :] = jnp.full((H, p, Ct), neg, dtype)
        xp_ref[p:p + H, p:p + W, :] = x_ref[...]
        src = xp_ref
    else:
        (mh_ref,) = scratch
        src = x_ref

    # ---- kh direction, output-strided (leading dim: pure addressing) ----
    # mh[oh, w, c] = max_{kh} src[oh*s + kh, w, c]
    def hslice(kh):
        idx = pl.ds(kh, Ho, stride=s) if s > 1 else pl.ds(kh, Ho)
        return src[idx, :, :]

    mh = hslice(0)
    for kh in range(1, k):
        mh = jnp.maximum(mh, hslice(kh))
    mh_ref[...] = mh                                   # (Ho, Wp, Ct)

    # ---- kw direction, output-strided (sublane-strided loads) ----
    # out[oh, ow, c] = max_{kw} mh[oh, ow*s + kw, c]
    def wslice(kw):
        idx = pl.ds(kw, Wo, stride=s) if s > 1 else pl.ds(kw, Wo)
        return mh_ref[:, idx, :]

    out = wslice(0)
    for kw in range(1, k):
        out = jnp.maximum(out, wslice(kw))
    o_ref[...] = out


# -------------------------------- Wrapper ------------------------------------

@functools.partial(jax.jit, static_argnames=("kernel_size", "stride", "padding"))
def impn_forward(x, kernel_size, stride, padding):
    """IMPN forward: MaxPool2d(kernel_size, stride, padding) on NCHW input."""
    k, s, p = kernel_size, stride, padding
    if p > k // 2:
        raise ValueError("padding must be <= kernel_size // 2 (PyTorch rule)")

    N, C, H, W = x.shape
    NC = N * C
    Hp, Wp = H + 2 * p, W + 2 * p
    Ho = (Hp - k) // s + 1          # PyTorch floor mode
    Wo = (Wp - k) // s + 1

    # Channels-last view: one transpose in, one (s^2-smaller) transpose out.
    xt = jnp.transpose(x.reshape(NC, H, W), (1, 2, 0))   # (H, W, NC)

    # ---- channel-tile size from a conservative per-step VMEM budget ----
    LANE = 128
    esz = x.dtype.itemsize
    if NC < LANE:
        # Too few channels to fill the lanes: use the full (small) channel dim
        # as a single block (full-dim last block is layout-legal).  Padding up
        # to 128 here would multiply HBM traffic, so we accept partial lanes.
        Ct, NCp = NC, NC
    else:
        # live bytes/channel ~ 2*in (double buffer) + 2*out + pad scratch
        #                      + kh-intermediate + value temporaries
        per_c = (2 * H * W + 2 * Ho * Wo + (Hp * Wp if p > 0 else 0)
                 + 2 * Ho * Wp + Ho * Wo) * esz
        budget = 8 * 1024 * 1024                       # safe on v5e/v6e/v7x
        ct_budget = max(LANE, (budget // per_c) // LANE * LANE)
        ct_steps = max(LANE, (NC // 8) // LANE * LANE)  # aim for >= ~8 steps
        Ct = min(ct_budget, ct_steps)
        NCp = pl.cdiv(NC, Ct) * Ct
        if NCp != NC:
            xt = jnp.pad(xt, ((0, 0), (0, 0), (0, NCp - NC)))

    scratch_shapes = [pltpu.VMEM((Ho, Wp, Ct), x.dtype)]        # mh
    if p > 0:
        scratch_shapes = [pltpu.VMEM((Hp, Wp, Ct), x.dtype)] + scratch_shapes

    kernel = functools.partial(
        _maxpool_kernel, k=k, s=s, p=p, H=H, W=W, Hp=Hp, Wp=Wp, Ho=Ho, Wo=Wo)

    out_t = pl.pallas_call(
        kernel,
        out_shape=jax.ShapeDtypeStruct((Ho, Wo, NCp), x.dtype),
        grid_spec=pltpu.PrefetchScalarGridSpec(
            num_scalar_prefetch=0,
            grid=(NCp // Ct,),
            in_specs=[pl.BlockSpec((H, W, Ct), lambda i: (0, 0, i))],
            out_specs=pl.BlockSpec((Ho, Wo, Ct), lambda i: (0, 0, i)),
            scratch_shapes=scratch_shapes,
        ),
        compiler_params=pltpu.CompilerParams(
            dimension_semantics=("parallel",),
            vmem_limit_bytes=32 * 1024 * 1024),
    )(xt)

    if NCp != NC:
        out_t = out_t[:, :, :NC]
    return jnp.transpose(out_t, (2, 0, 1)).reshape(N, C, Ho, Wo)


# ------------------------------ Reference (XLA) ------------------------------

def _reference_maxpool(x, k, s, p):
    return jax.lax.reduce_window(
        x, -jnp.inf, jax.lax.max,
        window_dimensions=(1, 1, k, k),
        window_strides=(1, 1, s, s),
        padding=((0, 0), (0, 0), (p, p), (p, p)))


# ---------------------------------- Main -------------------------------------

if __name__ == "__main__":
    key = jax.random.PRNGKey(0)

    N, C, H, W = 2, 4, 16, 16
    kernel_size, stride, padding = 3, 2, 1

    x = jax.random.normal(key, (N, C, H, W), jnp.float32)

    out = impn_forward(x, kernel_size, stride, padding)
    out = jax.block_until_ready(out)

    ref = jax.block_until_ready(_reference_maxpool(x, kernel_size, stride, padding))
    assert out.shape == ref.shape == (N, C, 8, 8), out.shape
    assert jnp.allclose(out, ref, atol=1e-6, rtol=1e-6), \
        f"max err {jnp.max(jnp.abs(out - ref))}"

    print("KERNEL_OK")
</pallas_src>

<mosaic_0001>
module attributes {stable_mosaic.version = 11 : i64} {
  func.func @_maxpool_kernel(%arg0: i32, %arg1: memref<16x16x8xf32, #tpu.memory_space<vmem>>, %arg2: memref<8x8x8xf32, #tpu.memory_space<vmem>>, %arg3: memref<18x18x8xf32, #tpu.memory_space<vmem>>, %arg4: memref<8x18x8xf32, #tpu.memory_space<vmem>>) attributes {dimension_semantics = [#tpu.dimension_semantics<parallel>], iteration_bounds = array<i64: 1>, scalar_prefetch = 0 : i64, scratch_operands = 2 : i64, tpu.core_type = #tpu.core_type<tc>, window_params = [{transform_indices = @transform_0, window_bounds = array<i64: 16, 16, 8>}, {transform_indices = @transform_1, window_bounds = array<i64: 8, 8, 8>}]} {
    %cst = arith.constant -3.40282347E+38 : f32
    %0 = vector.broadcast %cst : f32 to vector<1x18x8xf32>
    %c0 = arith.constant 0 : index
    %c0_0 = arith.constant 0 : index
    %c0_1 = arith.constant 0 : index
    %1 = vector.load %arg3[%c0, %c0_0, %c0_1] : memref<18x18x8xf32, #tpu.memory_space<vmem>>, vector<1x18x8xf32>
    tpu.vector_store %arg3[%c0, %c0_0, %c0_1], %0 {strides = array<i32>} : memref<18x18x8xf32, #tpu.memory_space<vmem>>, vector<1x18x8xf32>,
    %cst_2 = arith.constant -3.40282347E+38 : f32
    %2 = vector.broadcast %cst_2 : f32 to vector<1x18x8xf32>
    %c17 = arith.constant 17 : index
    %c0_3 = arith.constant 0 : index
    %c0_4 = arith.constant 0 : index
    %3 = vector.load %arg3[%c17, %c0_3, %c0_4] : memref<18x18x8xf32, #tpu.memory_space<vmem>>, vector<1x18x8xf32>
    tpu.vector_store %arg3[%c17, %c0_3, %c0_4], %2 {strides = array<i32>} : memref<18x18x8xf32, #tpu.memory_space<vmem>>, vector<1x18x8xf32>,
    %cst_5 = arith.constant -3.40282347E+38 : f32
    %4 = vector.broadcast %cst_5 : f32 to vector<16x1x8xf32>
    %c1 = arith.constant 1 : index
    %c0_6 = arith.constant 0 : index
    %c0_7 = arith.constant 0 : index
    %5 = vector.load %arg3[%c1, %c0_6, %c0_7] : memref<18x18x8xf32, #tpu.memory_space<vmem>>, vector<16x1x8xf32>
    tpu.vector_store %arg3[%c1, %c0_6, %c0_7], %4 {strides = array<i32>} : memref<18x18x8xf32, #tpu.memory_space<vmem>>, vector<16x1x8xf32>,
    %cst_8 = arith.constant -3.40282347E+38 : f32
    %6 = vector.broadcast %cst_8 : f32 to vector<16x1x8xf32>
    %c1_9 = arith.constant 1 : index
    %c17_10 = arith.constant 17 : index
    %c0_11 = arith.constant 0 : index
    %7 = vector.load %arg3[%c1_9, %c17_10, %c0_11] : memref<18x18x8xf32, #tpu.memory_space<vmem>>, vector<16x1x8xf32>
    tpu.vector_store %arg3[%c1_9, %c17_10, %c0_11], %6 {strides = array<i32>} : memref<18x18x8xf32, #tpu.memory_space<vmem>>, vector<16x1x8xf32>,
    %c0_12 = arith.constant 0 : index
    %c0_13 = arith.constant 0 : index
    %c0_14 = arith.constant 0 : index
    %8 = vector.load %arg1[%c0_12, %c0_13, %c0_14] : memref<16x16x8xf32, #tpu.memory_space<vmem>>, vector<16x16x8xf32>
    %c1_15 = arith.constant 1 : index
    %c1_16 = arith.constant 1 : index
    %c0_17 = arith.constant 0 : index
    %9 = vector.load %arg3[%c1_15, %c1_16, %c0_17] : memref<18x18x8xf32, #tpu.memory_space<vmem>>, vector<16x16x8xf32>
    tpu.vector_store %arg3[%c1_15, %c1_16, %c0_17], %8 {strides = array<i32>} : memref<18x18x8xf32, #tpu.memory_space<vmem>>, vector<16x16x8xf32>,
    %c0_18 = arith.constant 0 : index
    %c0_19 = arith.constant 0 : index
    %c0_20 = arith.constant 0 : index
    %10 = tpu.strided_load %arg3[%c0_18, %c0_19, %c0_20] {strides = array<i32: 2, 1, 1>} : memref<18x18x8xf32, #tpu.memory_space<vmem>>, vector<8x18x8xf32>
    %c1_21 = arith.constant 1 : index
    %c0_22 = arith.constant 0 : index
    %c0_23 = arith.constant 0 : index
    %11 = tpu.strided_load %arg3[%c1_21, %c0_22, %c0_23] {strides = array<i32: 2, 1, 1>} : memref<18x18x8xf32, #tpu.memory_space<vmem>>, vector<8x18x8xf32>
    %12 = arith.maximumf %10, %11 : vector<8x18x8xf32>
    %c2 = arith.constant 2 : index
    %c0_24 = arith.constant 0 : index
    %c0_25 = arith.constant 0 : index
    %13 = tpu.strided_load %arg3[%c2, %c0_24, %c0_25] {strides = array<i32: 2, 1, 1>} : memref<18x18x8xf32, #tpu.memory_space<vmem>>, vector<8x18x8xf32>
    %14 = arith.maximumf %12, %13 : vector<8x18x8xf32>
    %c0_26 = arith.constant 0 : index
    %c0_27 = arith.constant 0 : index
    %c0_28 = arith.constant 0 : index
    %15 = vector.load %arg4[%c0_26, %c0_27, %c0_28] : memref<8x18x8xf32, #tpu.memory_space<vmem>>, vector<8x18x8xf32>
    tpu.vector_store %arg4[%c0_26, %c0_27, %c0_28], %14 {strides = array<i32>} : memref<8x18x8xf32, #tpu.memory_space<vmem>>, vector<8x18x8xf32>,
    %c0_29 = arith.constant 0 : index
    %c0_30 = arith.constant 0 : index
    %c0_31 = arith.constant 0 : index
    %16 = tpu.strided_load %arg4[%c0_29, %c0_30, %c0_31] {strides = array<i32: 1, 2, 1>} : memref<8x18x8xf32, #tpu.memory_space<vmem>>, vector<8x8x8xf32>
    %c0_32 = arith.constant 0 : index
    %c1_33 = arith.constant 1 : index
    %c0_34 = arith.constant 0 : index
    %17 = tpu.strided_load %arg4[%c0_32, %c1_33, %c0_34] {strides = array<i32: 1, 2, 1>} : memref<8x18x8xf32, #tpu.memory_space<vmem>>, vector<8x8x8xf32>
    %18 = arith.maximumf %16, %17 : vector<8x8x8xf32>
    %c0_35 = arith.constant 0 : index
    %c2_36 = arith.constant 2 : index
    %c0_37 = arith.constant 0 : index
    %19 = tpu.strided_load %arg4[%c0_35, %c2_36, %c0_37] {strides = array<i32: 1, 2, 1>} : memref<8x18x8xf32, #tpu.memory_space<vmem>>, vector<8x8x8xf32>
    %20 = arith.maximumf %18, %19 : vector<8x8x8xf32>
    %c0_38 = arith.constant 0 : index
    %c0_39 = arith.constant 0 : index
    %c0_40 = arith.constant 0 : index
    %21 = vector.load %arg2[%c0_38, %c0_39, %c0_40] : memref<8x8x8xf32, #tpu.memory_space<vmem>>, vector<8x8x8xf32>
    tpu.vector_store %arg2[%c0_38, %c0_39, %c0_40], %20 {strides = array<i32>} : memref<8x8x8xf32, #tpu.memory_space<vmem>>, vector<8x8x8xf32>,
    return
  }
  func.func @transform_0(%arg0: i32) -> (i32, i32, i32) {
    %c0_i32 = arith.constant 0 : i32
    %c0_i32_0 = arith.constant 0 : i32
    %c0_i32_1 = arith.constant 0 : i32
    return %c0_i32, %c0_i32_0, %arg0 : i32, i32, i32
  }
  func.func @transform_1(%arg0: i32) -> (i32, i32, i32) {
    %c0_i32 = arith.constant 0 : i32
    %c0_i32_0 = arith.constant 0 : i32
    %c0_i32_1 = arith.constant 0 : i32
    return %c0_i32, %c0_i32_0, %arg0 : i32, i32, i32
  }
}

</mosaic_0001>

<llo_original>
// kernel: impn_forward.1
$region0: #{impn_forward.1}
  #allocation0 [shape = 'u32[]', space=smem, size = 0x4, offset = 0x4, fixed_abs, tag = 'smem constant byte address 0x4 - core index']
  #allocation1 [shape = 'u32[72,128]{1,0:T(1,128)}', space=vmem, size = 0x9000, scoped, tag = 'internal scratch']
  #allocation2 [shape = 'f32[18,18,8]{2,1,0:T(8,128)}', space=vmem, size = 0x36000, scoped, tag = 'scratch operand']
  #allocation3 [shape = 'f32[8,18,8]{2,1,0:T(8,128)}', space=vmem, size = 0x18000, scoped, tag = 'scratch operand']
  %s0 = inlined_call_operand.vmem [shape: f32[16,16,8], index: 0, kind: input, shape index: {}]
  %s1 = inlined_call_operand.vmem [shape: f32[8,8,8], index: 1, kind: output, shape index: {}]
  %s2 = sld [smem:[#allocation0]]
  $region14: #{impn_forward.1} parent=0
    _
  %s4 = ssub.s32 1, %s2
  %s5 = scalar_select 0, %s4, %s2
  // Predicated region
  $region2: #{impn_forward.1} parent=0 // pred_check
    _
  $region3: #{impn_forward.1} parent=0 // pred_check_branch
    %7 = sbr.rel (0) target = $region5
  $region4: #{impn_forward.1} parent=0 // pred_region
    _
  $region5: #{impn_forward.1} parent=0 // pred_fallthru
    _
  %vm8 = vcmask 64512
  %9 = vst.msk [vmem:[#allocation2] sm:$0xff] %vm8, -3.4028235e+38
  %10 = vst.msk [vmem:[#allocation2 + $0x8] sm:$0xff] %vm8, -3.4028235e+38
  %vm11 = vcmask 58368
  %12 = vst.msk [vmem:[#allocation2 + $0x10] sm:$0x3] %vm11, -3.4028235e+38
  %s13 = scalar_lea.vmem [#allocation2], 408
  %14 = vst.msk [vmem:[%s13] sm:$0xff] %vm8, -3.4028235e+38
  %15 = vst.msk [vmem:[%s13 + $0x8] sm:$0xff] %vm8, -3.4028235e+38
  %16 = vst.msk [vmem:[%s13 + $0x10] sm:$0x3] %vm11, -3.4028235e+38
  %s17 = scalar_lea.vmem [#allocation2], 24
  %vm18 = vcmask 57344
  %19 = vst.msk [vmem:[%s17] sm:$0x1] %vm18, -3.4028235e+38
  %20 = vst.msk [vmem:[%s17 + $0x18] sm:$0x1] %vm18, -3.4028235e+38
  %21 = vst.msk [vmem:[%s17 + $0x30] sm:$0x1] %vm18, -3.4028235e+38
  %22 = vst.msk [vmem:[%s17 + $0x48] sm:$0x1] %vm18, -3.4028235e+38
  %23 = vst.msk [vmem:[%s17 + $0x60] sm:$0x1] %vm18, -3.4028235e+38
  %24 = vst.msk [vmem:[%s17 + $0x78] sm:$0x1] %vm18, -3.4028235e+38
  %25 = vst.msk [vmem:[%s17 + $0x90] sm:$0x1] %vm18, -3.4028235e+38
  %26 = vst.msk [vmem:[%s17 + $0xa8] sm:$0x1] %vm18, -3.4028235e+38
  %27 = vst.msk [vmem:[%s17 + $0xc0] sm:$0x1] %vm18, -3.4028235e+38
  %28 = vst.msk [vmem:[%s17 + $0xd8] sm:$0x1] %vm18, -3.4028235e+38
  %29 = vst.msk [vmem:[%s17 + $0xf0] sm:$0x1] %vm18, -3.4028235e+38
  %30 = vst.msk [vmem:[%s17 + $0x108] sm:$0x1] %vm18, -3.4028235e+38
  %31 = vst.msk [vmem:[%s17 + $0x120] sm:$0x1] %vm18, -3.4028235e+38
  %32 = vst.msk [vmem:[%s17 + $0x138] sm:$0x1] %vm18, -3.4028235e+38
  %33 = vst.msk [vmem:[%s17 + $0x150] sm:$0x1] %vm18, -3.4028235e+38
  %34 = vst.msk [vmem:[%s17 + $0x168] sm:$0x1] %vm18, -3.4028235e+38
  %35 = vst.msk [vmem:[%s17 + $0x11] sm:$0x1] %vm18, -3.4028235e+38
  %36 = vst.msk [vmem:[%s17 + $0x29] sm:$0x1] %vm18, -3.4028235e+38
  %37 = vst.msk [vmem:[%s17 + $0x41] sm:$0x1] %vm18, -3.4028235e+38
  %38 = vst.msk [vmem:[%s17 + $0x59] sm:$0x1] %vm18, -3.4028235e+38
  %39 = vst.msk [vmem:[%s17 + $0x71] sm:$0x1] %vm18, -3.4028235e+38
  %40 = vst.msk [vmem:[%s17 + $0x89] sm:$0x1] %vm18, -3.4028235e+38
  %41 = vst.msk [vmem:[%s17 + $0xa1] sm:$0x1] %vm18, -3.4028235e+38
  %42 = vst.msk [vmem:[%s17 + $0xb9] sm:$0x1] %vm18, -3.4028235e+38
  %43 = vst.msk [vmem:[%s17 + $0xd1] sm:$0x1] %vm18, -3.4028235e+38
  %44 = vst.msk [vmem:[%s17 + $0xe9] sm:$0x1] %vm18, -3.4028235e+38
  %45 = vst.msk [vmem:[%s17 + $0x101] sm:$0x1] %vm18, -3.4028235e+38
  %46 = vst.msk [vmem:[%s17 + $0x119] sm:$0x1] %vm18, -3.4028235e+38
  %47 = vst.msk [vmem:[%s17 + $0x131] sm:$0x1] %vm18, -3.4028235e+38
  %48 = vst.msk [vmem:[%s17 + $0x149] sm:$0x1] %vm18, -3.4028235e+38
  %49 = vst.msk [vmem:[%s17 + $0x161] sm:$0x1] %vm18, -3.4028235e+38
  %50 = vst.msk [vmem:[%s17 + $0x179] sm:$0x1] %vm18, -3.4028235e+38
  %v51 = vld [vmem:[%s0] sm:$0xff]
  %v52 = vld [vmem:[%s0 + $0x8] sm:$0xff]
  %v53 = vld [vmem:[%s0 + $0x10] sm:$0xff]
  %v54 = vld [vmem:[%s0 + $0x18] sm:$0xff]
  %v55 = vld [vmem:[%s0 + $0x20] sm:$0xff]
  %v56 = vld [vmem:[%s0 + $0x28] sm:$0xff]
  %v57 = vld [vmem:[%s0 + $0x30] sm:$0xff]
  %v58 = vld [vmem:[%s0 + $0x38] sm:$0xff]
  %v59 = vld [vmem:[%s0 + $0x40] sm:$0xff]
  %v60 = vld [vmem:[%s0 + $0x48] sm:$0xff]
  %v61 = vld [vmem:[%s0 + $0x50] sm:$0xff]
  %v62 = vld [vmem:[%s0 + $0x58] sm:$0xff]
  %v63 = vld [vmem:[%s0 + $0x60] sm:$0xff]
  %v64 = vld [vmem:[%s0 + $0x68] sm:$0xff]
  %v65 = vld [vmem:[%s0 + $0x70] sm:$0xff]
  %v66 = vld [vmem:[%s0 + $0x78] sm:$0xff]
  %v67 = vld [vmem:[%s0 + $0x80] sm:$0xff]
  %v68 = vld [vmem:[%s0 + $0x88] sm:$0xff]
  %v69 = vld [vmem:[%s0 + $0x90] sm:$0xff]
  %v70 = vld [vmem:[%s0 + $0x98] sm:$0xff]
  %v71 = vld [vmem:[%s0 + $0xa0] sm:$0xff]
  %v72 = vld [vmem:[%s0 + $0xa8] sm:$0xff]
  %v73 = vld [vmem:[%s0 + $0xb0] sm:$0xff]
  %v74 = vld [vmem:[%s0 + $0xb8] sm:$0xff]
  %v75 = vld [vmem:[%s0 + $0xc0] sm:$0xff]
  %v76 = vld [vmem:[%s0 + $0xc8] sm:$0xff]
  %v77 = vld [vmem:[%s0 + $0xd0] sm:$0xff]
  %v78 = vld [vmem:[%s0 + $0xd8] sm:$0xff]
  %v79 = vld [vmem:[%s0 + $0xe0] sm:$0xff]
  %v80 = vld [vmem:[%s0 + $0xe8] sm:$0xff]
  %v81 = vld [vmem:[%s0 + $0xf0] sm:$0xff]
  %v82 = vld [vmem:[%s0 + $0xf8] sm:$0xff]
  %83 = vst.msk [vmem:[%s17 + $0x1] sm:$0xff] %vm8, %v51
  %84 = vst.msk [vmem:[%s17 + $0x9] sm:$0xff] %vm8, %v52
  %85 = vst.msk [vmem:[%s17 + $0x19] sm:$0xff] %vm8, %v53
  %86 = vst.msk [vmem:[%s17 + $0x21] sm:$0xff] %vm8, %v54
  %87 = vst.msk [vmem:[%s17 + $0x31] sm:$0xff] %vm8, %v55
  %88 = vst.msk [vmem:[%s17 + $0x39] sm:$0xff] %vm8, %v56
  %89 = vst.msk [vmem:[%s17 + $0x49] sm:$0xff] %vm8, %v57
  %90 = vst.msk [vmem:[%s17 + $0x51] sm:$0xff] %vm8, %v58
  %91 = vst.msk [vmem:[%s17 + $0x61] sm:$0xff] %vm8, %v59
  %92 = vst.msk [vmem:[%s17 + $0x69] sm:$0xff] %vm8, %v60
  %93 = vst.msk [vmem:[%s17 + $0x79] sm:$0xff] %vm8, %v61
  %94 = vst.msk [vmem:[%s17 + $0x81] sm:$0xff] %vm8, %v62
  %95 = vst.msk [vmem:[%s17 + $0x91] sm:$0xff] %vm8, %v63
  %96 = vst.msk [vmem:[%s17 + $0x99] sm:$0xff] %vm8, %v64
  %97 = vst.msk [vmem:[%s17 + $0xa9] sm:$0xff] %vm8, %v65
  %98 = vst.msk [vmem:[%s17 + $0xb1] sm:$0xff] %vm8, %v66
  %99 = vst.msk [vmem:[%s17 + $0xc1] sm:$0xff] %vm8, %v67
  %100 = vst.msk [vmem:[%s17 + $0xc9] sm:$0xff] %vm8, %v68
  %101 = vst.msk [vmem:[%s17 + $0xd9] sm:$0xff] %vm8, %v69
  %102 = vst.msk [vmem:[%s17 + $0xe1] sm:$0xff] %vm8, %v70
  %103 = vst.msk [vmem:[%s17 + $0xf1] sm:$0xff] %vm8, %v71
  %104 = vst.msk [vmem:[%s17 + $0xf9] sm:$0xff] %vm8, %v72
  %105 = vst.msk [vmem:[%s17 + $0x109] sm:$0xff] %vm8, %v73
  %106 = vst.msk [vmem:[%s17 + $0x111] sm:$0xff] %vm8, %v74
  %107 = vst.msk [vmem:[%s17 + $0x121] sm:$0xff] %vm8, %v75
  %108 = vst.msk [vmem:[%s17 + $0x129] sm:$0xff] %vm8, %v76
  %109 = vst.msk [vmem:[%s17 + $0x139] sm:$0xff] %vm8, %v77
  %110 = vst.msk [vmem:[%s17 + $0x141] sm:$0xff] %vm8, %v78
  %111 = vst.msk [vmem:[%s17 + $0x151] sm:$0xff] %vm8, %v79
  %112 = vst.msk [vmem:[%s17 + $0x159] sm:$0xff] %vm8, %v80
  %113 = vst.msk [vmem:[%s17 + $0x169] sm:$0xff] %vm8, %v81
  %114 = vst.msk [vmem:[%s17 + $0x171] sm:$0xff] %vm8, %v82
  %v115 = vld [vmem:[#allocation2] sm:$0xff]
  %v116 = vld [vmem:[#allocation2 + $0x8] sm:$0xff]
  %v117 = vld [vmem:[#allocation2 + $0x10] sm:$0x3]
  %v118 = vld [vmem:[#allocation2 + $0x30] sm:$0xff]
  %v119 = vld [vmem:[#allocation2 + $0x38] sm:$0xff]
  %v120 = vld [vmem:[#allocation2 + $0x40] sm:$0x3]
  %v121 = vld [vmem:[#allocation2 + $0x60] sm:$0xff]
  %v122 = vld [vmem:[#allocation2 + $0x68] sm:$0xff]
  %v123 = vld [vmem:[#allocation2 + $0x70] sm:$0x3]
  %v124 = vld [vmem:[#allocation2 + $0x90] sm:$0xff]
  %v125 = vld [vmem:[#allocation2 + $0x98] sm:$0xff]
  %v126 = vld [vmem:[#allocation2 + $0xa0] sm:$0x3]
  %v127 = vld [vmem:[#allocation2 + $0xc0] sm:$0xff]
  %v128 = vld [vmem:[#allocation2 + $0xc8] sm:$0xff]
  %v129 = vld [vmem:[#allocation2 + $0xd0] sm:$0x3]
  %v130 = vld [vmem:[#allocation2 + $0xf0] sm:$0xff]
  %v131 = vld [vmem:[#allocation2 + $0xf8] sm:$0xff]
  %v132 = vld [vmem:[#allocation2 + $0x100] sm:$0x3]
  %v133 = vld [vmem:[#allocation2 + $0x120] sm:$0xff]
  %v134 = vld [vmem:[#allocation2 + $0x128] sm:$0xff]
  %v135 = vld [vmem:[#allocation2 + $0x130] sm:$0x3]
  %v136 = vld [vmem:[#allocation2 + $0x150] sm:$0xff]
  %v137 = vld [vmem:[#allocation2 + $0x158] sm:$0xff]
  %v138 = vld [vmem:[#allocation2 + $0x160] sm:$0x3]
  %v139 = vld [vmem:[%s17] sm:$0xff]
  %v140 = vld [vmem:[%s17 + $0x8] sm:$0xff]
  %v141 = vld [vmem:[%s17 + $0x10] sm:$0x3]
  %v142 = vld [vmem:[%s17 + $0x30] sm:$0xff]
  %v143 = vld [vmem:[%s17 + $0x38] sm:$0xff]
  %v144 = vld [vmem:[%s17 + $0x40] sm:$0x3]
  %v145 = vld [vmem:[%s17 + $0x60] sm:$0xff]
  %v146 = vld [vmem:[%s17 + $0x68] sm:$0xff]
  %v147 = vld [vmem:[%s17 + $0x70] sm:$0x3]
  %v148 = vld [vmem:[%s17 + $0x90] sm:$0xff]
  %v149 = vld [vmem:[%s17 + $0x98] sm:$0xff]
  %v150 = vld [vmem:[%s17 + $0xa0] sm:$0x3]
  %v151 = vld [vmem:[%s17 + $0xc0] sm:$0xff]
  %v152 = vld [vmem:[%s17 + $0xc8] sm:$0xff]
  %v153 = vld [vmem:[%s17 + $0xd0] sm:$0x3]
  %v154 = vld [vmem:[%s17 + $0xf0] sm:$0xff]
  %v155 = vld [vmem:[%s17 + $0xf8] sm:$0xff]
  %v156 = vld [vmem:[%s17 + $0x100] sm:$0x3]
  %v157 = vld [vmem:[%s17 + $0x120] sm:$0xff]
  %v158 = vld [vmem:[%s17 + $0x128] sm:$0xff]
  %v159 = vld [vmem:[%s17 + $0x130] sm:$0x3]
  %v160 = vld [vmem:[%s17 + $0x150] sm:$0xff]
  %v161 = vld [vmem:[%s17 + $0x158] sm:$0xff]
  %v162 = vld [vmem:[%s17 + $0x160] sm:$0x3]
  %v163 = vmax.f32 %v115, %v139
  %v164 = vmax.f32 %v116, %v140
  %v165 = vmax.f32 %v117, %v141
  %v166 = vmax.f32 %v118, %v142
  %v167 = vmax.f32 %v119, %v143
  %v168 = vmax.f32 %v120, %v144
  %v169 = vmax.f32 %v121, %v145
  %v170 = vmax.f32 %v122, %v146
  %v171 = vmax.f32 %v123, %v147
  %v172 = vmax.f32 %v124, %v148
  %v173 = vmax.f32 %v125, %v149
  %v174 = vmax.f32 %v126, %v150
  %v175 = vmax.f32 %v127, %v151
  %v176 = vmax.f32 %v128, %v152
  %v177 = vmax.f32 %v129, %v153
  %v178 = vmax.f32 %v130, %v154
  %v179 = vmax.f32 %v131, %v155
  %v180 = vmax.f32 %v132, %v156
  %v181 = vmax.f32 %v133, %v157
  %v182 = vmax.f32 %v134, %v158
  %v183 = vmax.f32 %v135, %v159
  %v184 = vmax.f32 %v136, %v160
  %v185 = vmax.f32 %v137, %v161
  %v186 = vmax.f32 %v138, %v162
  %s187 = scalar_lea.vmem [#allocation2], 48
  %v188 = vld [vmem:[%s187] sm:$0xff]
  %v189 = vld [vmem:[%s187 + $0x8] sm:$0xff]
  %v190 = vld [vmem:[%s187 + $0x10] sm:$0x3]
  %v191 = vld [vmem:[%s187 + $0x30] sm:$0xff]
  %v192 = vld [vmem:[%s187 + $0x38] sm:$0xff]
  %v193 = vld [vmem:[%s187 + $0x40] sm:$0x3]
  %v194 = vld [vmem:[%s187 + $0x60] sm:$0xff]
  %v195 = vld [vmem:[%s187 + $0x68] sm:$0xff]
  %v196 = vld [vmem:[%s187 + $0x70] sm:$0x3]
  %v197 = vld [vmem:[%s187 + $0x90] sm:$0xff]
  %v198 = vld [vmem:[%s187 + $0x98] sm:$0xff]
  %v199 = vld [vmem:[%s187 + $0xa0] sm:$0x3]
  %v200 = vld [vmem:[%s187 + $0xc0] sm:$0xff]
  %v201 = vld [vmem:[%s187 + $0xc8] sm:$0xff]
  %v202 = vld [vmem:[%s187 + $0xd0] sm:$0x3]
  %v203 = vld [vmem:[%s187 + $0xf0] sm:$0xff]
  %v204 = vld [vmem:[%s187 + $0xf8] sm:$0xff]
  %v205 = vld [vmem:[%s187 + $0x100] sm:$0x3]
  %v206 = vld [vmem:[%s187 + $0x120] sm:$0xff]
  %v207 = vld [vmem:[%s187 + $0x128] sm:$0xff]
  %v208 = vld [vmem:[%s187 + $0x130] sm:$0x3]
  %v209 = vld [vmem:[%s187 + $0x150] sm:$0xff]
  %v210 = vld [vmem:[%s187 + $0x158] sm:$0xff]
  %v211 = vld [vmem:[%s187 + $0x160] sm:$0x3]
  %v212 = vmax.f32 %v163, %v188
  %v213 = vmax.f32 %v164, %v189
  %v214 = vmax.f32 %v165, %v190
  %v215 = vmax.f32 %v166, %v191
  %v216 = vmax.f32 %v167, %v192
  %v217 = vmax.f32 %v168, %v193
  %v218 = vmax.f32 %v169, %v194
  %v219 = vmax.f32 %v170, %v195
  %v220 = vmax.f32 %v171, %v196
  %v221 = vmax.f32 %v172, %v197
  %v222 = vmax.f32 %v173, %v198
  %v223 = vmax.f32 %v174, %v199
  %v224 = vmax.f32 %v175, %v200
  %v225 = vmax.f32 %v176, %v201
  %v226 = vmax.f32 %v177, %v202
  %v227 = vmax.f32 %v178, %v203
  %v228 = vmax.f32 %v179, %v204
  %v229 = vmax.f32 %v180, %v205
  %v230 = vmax.f32 %v181, %v206
  %v231 = vmax.f32 %v182, %v207
  %v232 = vmax.f32 %v183, %v208
  %v233 = vmax.f32 %v184, %v209
  %v234 = vmax.f32 %v185, %v210
  %v235 = vmax.f32 %v186, %v211
  %236 = vst.msk [vmem:[#allocation3] sm:$0xff] %vm8, %v212
  %237 = vst.msk [vmem:[#allocation3 + $0x8] sm:$0xff] %vm8, %v213
  %238 = vst.msk [vmem:[#allocation3 + $0x10] sm:$0x3] %vm11, %v214
  %239 = vst.msk [vmem:[#allocation3 + $0x18] sm:$0xff] %vm8, %v215
  %240 = vst.msk [vmem:[#allocation3 + $0x20] sm:$0xff] %vm8, %v216
  %241 = vst.msk [vmem:[#allocation3 + $0x28] sm:$0x3] %vm11, %v217
  %242 = vst.msk [vmem:[#allocation3 + $0x30] sm:$0xff] %vm8, %v218
  %243 = vst.msk [vmem:[#allocation3 + $0x38] sm:$0xff] %vm8, %v219
  %244 = vst.msk [vmem:[#allocation3 + $0x40] sm:$0x3] %vm11, %v220
  %245 = vst.msk [vmem:[#allocation3 + $0x48] sm:$0xff] %vm8, %v221
  %246 = vst.msk [vmem:[#allocation3 + $0x50] sm:$0xff] %vm8, %v222
  %247 = vst.msk [vmem:[#allocation3 + $0x58] sm:$0x3] %vm11, %v223
  %248 = vst.msk [vmem:[#allocation3 + $0x60] sm:$0xff] %vm8, %v224
  %249 = vst.msk [vmem:[#allocation3 + $0x68] sm:$0xff] %vm8, %v225
  %250 = vst.msk [vmem:[#allocation3 + $0x70] sm:$0x3] %vm11, %v226
  %251 = vst.msk [vmem:[#allocation3 + $0x78] sm:$0xff] %vm8, %v227
  %252 = vst.msk [vmem:[#allocation3 + $0x80] sm:$0xff] %vm8, %v228
  %253 = vst.msk [vmem:[#allocation3 + $0x88] sm:$0x3] %vm11, %v229
  %254 = vst.msk [vmem:[#allocation3 + $0x90] sm:$0xff] %vm8, %v230
  %255 = vst.msk [vmem:[#allocation3 + $0x98] sm:$0xff] %vm8, %v231
  %256 = vst.msk [vmem:[#allocation3 + $0xa0] sm:$0x3] %vm11, %v232
  %257 = vst.msk [vmem:[#allocation3 + $0xa8] sm:$0xff] %vm8, %v233
  %258 = vst.msk [vmem:[#allocation3 + $0xb0] sm:$0xff] %vm8, %v234
  %259 = vst.msk [vmem:[#allocation3 + $0xb8] sm:$0x3] %vm11, %v235
  %v260 = vld [vmem:[#allocation3] ss:$2 sm:$0xff]
  %s261 = scalar_lea.vmem [#allocation3], 24
  %v262 = vld [vmem:[%s261] ss:$2 sm:$0xff]
  %s263 = scalar_lea.vmem [#allocation3], 48
  %v264 = vld [vmem:[%s263] ss:$2 sm:$0xff]
  %s265 = scalar_lea.vmem [#allocation3], 72
  %v266 = vld [vmem:[%s265] ss:$2 sm:$0xff]
  %s267 = scalar_lea.vmem [#allocation3], 96
  %v268 = vld [vmem:[%s267] ss:$2 sm:$0xff]
  %s269 = scalar_lea.vmem [#allocation3], 120
  %v270 = vld [vmem:[%s269] ss:$2 sm:$0xff]
  %s271 = scalar_lea.vmem [#allocation3], 144
  %v272 = vld [vmem:[%s271] ss:$2 sm:$0xff]
  %s273 = scalar_lea.vmem [#allocation3], 168
  %v274 = vld [vmem:[%s273] ss:$2 sm:$0xff]
  %s275 = scalar_lea.vmem [#allocation3], 1
  %v276 = vld [vmem:[%s275] ss:$2 sm:$0xff]
  %s277 = scalar_lea.vmem [#allocation3], 25
  %v278 = vld [vmem:[%s277] ss:$2 sm:$0xff]
  %s279 = scalar_lea.vmem [#allocation3], 49
  %v280 = vld [vmem:[%s279] ss:$2 sm:$0xff]
  %s281 = scalar_lea.vmem [#allocation3], 73
  %v282 = vld [vmem:[%s281] ss:$2 sm:$0xff]
  %s283 = scalar_lea.vmem [#allocation3], 97
  %v284 = vld [vmem:[%s283] ss:$2 sm:$0xff]
  %s285 = scalar_lea.vmem [#allocation3], 121
  %v286 = vld [vmem:[%s285] ss:$2 sm:$0xff]
  %s287 = scalar_lea.vmem [#allocation3], 145
  %v288 = vld [vmem:[%s287] ss:$2 sm:$0xff]
  %s289 = scalar_lea.vmem [#allocation3], 169
  %v290 = vld [vmem:[%s289] ss:$2 sm:$0xff]
  %v291 = vmax.f32 %v260, %v276
  %v292 = vmax.f32 %v262, %v278
  %v293 = vmax.f32 %v264, %v280
  %v294 = vmax.f32 %v266, %v282
  %v295 = vmax.f32 %v268, %v284
  %v296 = vmax.f32 %v270, %v286
  %v297 = vmax.f32 %v272, %v288
  %v298 = vmax.f32 %v274, %v290
  %s299 = scalar_lea.vmem [#allocation3], 2
  %v300 = vld [vmem:[%s299] ss:$2 sm:$0xff]
  %s301 = scalar_lea.vmem [#allocation3], 26
  %v302 = vld [vmem:[%s301] ss:$2 sm:$0xff]
  %s303 = scalar_lea.vmem [#allocation3], 50
  %v304 = vld [vmem:[%s303] ss:$2 sm:$0xff]
  %s305 = scalar_lea.vmem [#allocation3], 74
  %v306 = vld [vmem:[%s305] ss:$2 sm:$0xff]
  %s307 = scalar_lea.vmem [#allocation3], 98
  %v308 = vld [vmem:[%s307] ss:$2 sm:$0xff]
  %s309 = scalar_lea.vmem [#allocation3], 122
  %v310 = vld [vmem:[%s309] ss:$2 sm:$0xff]
  %s311 = scalar_lea.vmem [#allocation3], 146
  %v312 = vld [vmem:[%s311] ss:$2 sm:$0xff]
  %s313 = scalar_lea.vmem [#allocation3], 170
  %v314 = vld [vmem:[%s313] ss:$2 sm:$0xff]
  %v315 = vmax.f32 %v291, %v300
  %v316 = vmax.f32 %v292, %v302
  %v317 = vmax.f32 %v293, %v304
  %v318 = vmax.f32 %v294, %v306
  %v319 = vmax.f32 %v295, %v308
  %v320 = vmax.f32 %v296, %v310
  %v321 = vmax.f32 %v297, %v312
  %v322 = vmax.f32 %v298, %v314
  %323 = vst.msk [vmem:[%s1] sm:$0xff] %vm8, %v315
  %324 = vst.msk [vmem:[%s1 + $0x8] sm:$0xff] %vm8, %v316
  %325 = vst.msk [vmem:[%s1 + $0x10] sm:$0xff] %vm8, %v317
  %326 = vst.msk [vmem:[%s1 + $0x18] sm:$0xff] %vm8, %v318
  %327 = vst.msk [vmem:[%s1 + $0x20] sm:$0xff] %vm8, %v319
  %328 = vst.msk [vmem:[%s1 + $0x28] sm:$0xff] %vm8, %v320
  %329 = vst.msk [vmem:[%s1 + $0x30] sm:$0xff] %vm8, %v321
  %330 = vst.msk [vmem:[%s1 + $0x38] sm:$0xff] %vm8, %v322
  // Predicated region
  $region6: #{impn_forward.1} parent=0 // pred_check
    _
  $region7: #{impn_forward.1} parent=0 // pred_check_branch
    %332 = sbr.rel (0) target = $region9
  $region8: #{impn_forward.1} parent=0 // pred_region
    _
  $region9: #{impn_forward.1} parent=0 // pred_fallthru
    _
  // Predicated region
  $region10: #{impn_forward.1} parent=0 // pred_check
    _
  $region11: #{impn_forward.1} parent=0 // pred_check_branch
    %334 = sbr.rel (0) target = $region13
  $region12: #{impn_forward.1} parent=0 // pred_region
    _
  $region13: #{impn_forward.1} parent=0 // pred_fallthru
    _

</llo_original>
